<compile_context>
chip_gen: v7x
topology: tpu7x:2x2x1
jax: 0.10.0
libtpu: 0.0.40
codegen_flags: <defaults>
</compile_context>

<pallas_src>
from functools import partial

import jax
import jax.numpy as jnp
from jax.experimental import pallas as pl
from jax.experimental.pallas import tpu as pltpu

BN_EPS = 1e-5


# -----------------------------------------------------------------------------
# Parameter preparation — call ONCE at init time, not per forward.
# -----------------------------------------------------------------------------
def prepare_value_net_params(w, b, gamma, beta, mxu_dtype=jnp.float32):
    """Cast/shape the value-net parameters once, outside the per-step forward.

    The Linear bias `b` is accepted for API parity but not used: under
    training-mode BatchNorm1d it cancels exactly ((y+b)-mean(y+b) == y-mean(y)).
    # TODO(synk): if the module is ever run in eval mode (running statistics),
    # the bias no longer cancels and must be added back before normalization.
    """
    del b
    return {
        "w": jnp.asarray(w).astype(mxu_dtype),                      # [F, V]
        "gamma": jnp.asarray(gamma).astype(jnp.float32).reshape(1, -1),
        "beta": jnp.asarray(beta).astype(jnp.float32).reshape(1, -1),
    }


# -----------------------------------------------------------------------------
# Small-B path: single fused grid-less kernel (whole problem fits in VMEM).
# -----------------------------------------------------------------------------
def _fused_value_net_kernel(x_ref, w_ref, gamma_ref, beta_ref, out_ref):
    # x: [B, F], w: [F, V], gamma/beta: [1, V], out: [B, V]
    w = w_ref[...]
    x = x_ref[...].astype(w.dtype)  # no-op for f32; bf16 for the MXU option
    y = jnp.dot(x, w, preferred_element_type=jnp.float32)

    # Training-mode BatchNorm1d statistics (biased variance). Two-pass form:
    # y is fully resident, and the centered value is reused by the epilogue,
    # so this costs no extra per-element work vs. the one-pass formula while
    # avoiding E[y^2]-mean^2 cancellation.
    mean = jnp.mean(y, axis=0, keepdims=True)
    d = y - mean
    var = jnp.mean(d * d, axis=0, keepdims=True)

    # gamma folded into the rsqrt on the (1, V) row (rsqrt runs on the EUP);
    # per-element epilogue is just mul, add, max.
    scale = gamma_ref[...] * jax.lax.rsqrt(var + BN_EPS)
    out_ref[...] = jnp.maximum(d * scale + beta_ref[...], 0.0)


def _value_net_fused(features, params):
    B = features.shape[0]
    V = params["w"].shape[1]
    vmem = pltpu.MemorySpace.VMEM
    return pl.pallas_call(
        _fused_value_net_kernel,
        out_shape=jax.ShapeDtypeStruct((B, V), jnp.float32),
        in_specs=[pl.BlockSpec(memory_space=vmem)] * 4,
        out_specs=pl.BlockSpec(memory_space=vmem),
    )(features, params["w"], params["gamma"], params["beta"])


# -----------------------------------------------------------------------------
# Large-B path: pipelined grid over B (pass 1: matmul + stats, pass 2: BN+ReLU).
# -----------------------------------------------------------------------------
def _matmul_stats_kernel(x_ref, w_ref, y_ref, stats_ref):
    # Pass 1. y tile = x tile @ w; accumulate shifted per-column sum and
    # sum-of-squares into the resident stats block (constant block index across
    # the "arbitrary" B axis). stats rows: [sum(y-c), sum((y-c)^2), c].
    i = pl.program_id(0)
    w = w_ref[...]
    x = x_ref[...].astype(w.dtype)
    y = jnp.dot(x, w, preferred_element_type=jnp.float32)
    y_ref[...] = y

    @pl.when(i == 0)
    def _():
        # Per-column shift c taken from the first tile keeps the one-pass
        # variance well conditioned even when |mean(y)| >> std(y).
        c0 = jnp.mean(y, axis=0, keepdims=True)
        stats_ref[0:1, :] = jnp.zeros_like(c0)
        stats_ref[1:2, :] = jnp.zeros_like(c0)
        stats_ref[2:3, :] = c0

    c = stats_ref[2:3, :]
    d = y - c
    stats_ref[0:1, :] += jnp.sum(d, axis=0, keepdims=True)
    stats_ref[1:2, :] += jnp.sum(d * d, axis=0, keepdims=True)


def _bn_relu_kernel(stats_ref, gamma_ref, beta_ref, y_ref, out_ref, *, inv_n):
    # Pass 2. All statistics math is (1, V) row work; the per-element epilogue
    # is mul, add, max (mean folded into an additive shift).
    sum_d = stats_ref[0:1, :]
    sumsq_d = stats_ref[1:2, :]
    c = stats_ref[2:3, :]
    mean_d = sum_d * inv_n
    var = jnp.maximum(sumsq_d * inv_n - mean_d * mean_d, 0.0)
    mean = c + mean_d
    scale = gamma_ref[...] * jax.lax.rsqrt(var + BN_EPS)
    shift = beta_ref[...] - mean * scale
    out_ref[...] = jnp.maximum(y_ref[...] * scale + shift, 0.0)


def _value_net_tiled(features, params, tile_b):
    B, F = features.shape
    w = params["w"]
    V = w.shape[1]
    assert B % tile_b == 0
    n_tiles = B // tile_b

    # Pass 1: B axis must be "arbitrary" (resident stats accumulator).
    y, stats = pl.pallas_call(
        _matmul_stats_kernel,
        out_shape=(
            jax.ShapeDtypeStruct((B, V), jnp.float32),
            jax.ShapeDtypeStruct((3, V), jnp.float32),
        ),
        grid=(n_tiles,),
        in_specs=[
            pl.BlockSpec((tile_b, F), lambda i: (i, 0)),
            pl.BlockSpec((F, V), lambda i: (0, 0)),
        ],
        out_specs=(
            pl.BlockSpec((tile_b, V), lambda i: (i, 0)),
            pl.BlockSpec((3, V), lambda i: (0, 0)),
        ),
        compiler_params=pltpu.CompilerParams(
            dimension_semantics=("arbitrary",)),
    )(features, w)

    # Pass 2: tiles are independent -> "parallel" (dual TensorCores on v7x).
    out = pl.pallas_call(
        partial(_bn_relu_kernel, inv_n=1.0 / B),
        out_shape=jax.ShapeDtypeStruct((B, V), jnp.float32),
        grid=(n_tiles,),
        in_specs=[
            pl.BlockSpec((3, V), lambda i: (0, 0)),
            pl.BlockSpec((1, V), lambda i: (0, 0)),
            pl.BlockSpec((1, V), lambda i: (0, 0)),
            pl.BlockSpec((tile_b, V), lambda i: (i, 0)),
        ],
        out_specs=pl.BlockSpec((tile_b, V), lambda i: (i, 0)),
        compiler_params=pltpu.CompilerParams(
            dimension_semantics=("parallel",)),
    )(stats, params["gamma"], params["beta"], y)
    return out


# -----------------------------------------------------------------------------
# Module forward
# -----------------------------------------------------------------------------
def custom_mlp_extractor_forward(features, params, *, tile_b=128):
    """Returns (latent_pi, latent_vf) matching CustomMlpExtractor.forward."""
    B = features.shape[0]
    if B % tile_b == 0 and B // tile_b >= 2:
        value_latent = _value_net_tiled(features, params, tile_b)
    else:
        value_latent = _value_net_fused(features, params)
    # policy_net is an empty nn.Sequential -> identity on the features.
    return features, value_latent


def _reference_forward(features, w, b, gamma, beta):
    y = features @ w + b[None, :]
    mean = jnp.mean(y, axis=0, keepdims=True)
    var = jnp.mean((y - mean) ** 2, axis=0, keepdims=True)
    z = (y - mean) / jnp.sqrt(var + BN_EPS) * gamma[None, :] + beta[None, :]
    return features, jnp.maximum(z, 0.0)


if __name__ == "__main__":
    FEATURES_DIM = 32
    LAST_LAYER_DIM_VF = 64  # default last_layer_dim_vf

    key = jax.random.PRNGKey(0)
    k_x, k_xl, k_w, k_b = jax.random.split(key, 4)

    # Deterministic parameter init (PyTorch Linear-style uniform bound).
    bound = 1.0 / (FEATURES_DIM ** 0.5)
    w = jax.random.uniform(
        k_w, (FEATURES_DIM, LAST_LAYER_DIM_VF),
        minval=-bound, maxval=bound, dtype=jnp.float32)
    b = jax.random.uniform(
        k_b, (LAST_LAYER_DIM_VF,),
        minval=-bound, maxval=bound, dtype=jnp.float32)
    gamma = jnp.ones((LAST_LAYER_DIM_VF,), dtype=jnp.float32)   # BN weight
    beta = jnp.zeros((LAST_LAYER_DIM_VF,), dtype=jnp.float32)   # BN bias

    # Parameter prep happens ONCE, outside the per-call hot path.
    params_f32 = prepare_value_net_params(w, b, gamma, beta)

    # --- small batch: fused grid-less kernel --------------------------------
    B_small = 8
    x_small = jax.random.normal(k_x, (B_small, FEATURES_DIM), dtype=jnp.float32)
    pi_s, vf_s = custom_mlp_extractor_forward(x_small, params_f32)
    pi_s = jax.block_until_ready(pi_s)
    vf_s = jax.block_until_ready(vf_s)
    ref_pi_s, ref_vf_s = _reference_forward(x_small, w, b, gamma, beta)
    assert pi_s.shape == (B_small, FEATURES_DIM)
    assert vf_s.shape == (B_small, LAST_LAYER_DIM_VF)
    assert jnp.allclose(pi_s, ref_pi_s, atol=1e-5, rtol=1e-5)
    assert jnp.allclose(vf_s, ref_vf_s, atol=1e-4, rtol=1e-4)

    # --- larger batch: pipelined two-pass path (grid over B) ----------------
    B_large = 256
    x_large = jax.random.normal(k_xl, (B_large, FEATURES_DIM), dtype=jnp.float32)
    pi_l, vf_l = custom_mlp_extractor_forward(x_large, params_f32, tile_b=128)
    vf_l = jax.block_until_ready(vf_l)
    ref_pi_l, ref_vf_l = _reference_forward(x_large, w, b, gamma, beta)
    assert vf_l.shape == (B_large, LAST_LAYER_DIM_VF)
    assert jnp.allclose(vf_l, ref_vf_l, atol=2e-4, rtol=2e-4)

    # --- bf16 MXU operands (rollout-scale option); stats/epilogue stay f32 --
    params_bf16 = prepare_value_net_params(w, b, gamma, beta,
                                           mxu_dtype=jnp.bfloat16)
    _, vf_bf16 = custom_mlp_extractor_forward(x_large, params_bf16, tile_b=128)
    vf_bf16 = jax.block_until_ready(vf_bf16)
    assert vf_bf16.shape == (B_large, LAST_LAYER_DIM_VF)
    assert jnp.allclose(vf_bf16, ref_vf_l, atol=1e-1, rtol=1e-1)

    print("KERNEL_OK")
</pallas_src>

<mosaic_0001>
module attributes {stable_mosaic.version = 11 : i64} {
  func.func @_fused_value_net_kernel(%arg0: memref<8x32xf32, #tpu.memory_space<vmem>>, %arg1: memref<32x64xf32, #tpu.memory_space<vmem>>, %arg2: memref<1x64xf32, #tpu.memory_space<vmem>>, %arg3: memref<1x64xf32, #tpu.memory_space<vmem>>, %arg4: memref<8x64xf32, #tpu.memory_space<vmem>>) attributes {dimension_semantics = [], scalar_prefetch = 0 : i64, scratch_operands = 0 : i64, tpu.core_type = #tpu.core_type<tc>} {
    %c0 = arith.constant 0 : index
    %c0_0 = arith.constant 0 : index
    %0 = vector.load %arg1[%c0, %c0_0] : memref<32x64xf32, #tpu.memory_space<vmem>>, vector<32x64xf32>
    %c0_1 = arith.constant 0 : index
    %c0_2 = arith.constant 0 : index
    %1 = vector.load %arg0[%c0_1, %c0_2] : memref<8x32xf32, #tpu.memory_space<vmem>>, vector<8x32xf32>
    %cst = arith.constant dense<0.000000e+00> : vector<8x64xf32>
    %2 = tpu.matmul %1, %0, %cst {dimension_numbers = #tpu.dot_dimension_numbers<[1], [0], [0], [1], [0, 0, 1, 1], [], []>} : vector<8x32xf32>, vector<32x64xf32>, vector<8x64xf32> -> vector<8x64xf32>
    %cst_3 = arith.constant dense<0.000000e+00> : vector<64xf32>
    %3 = vector.multi_reduction <add>, %2, %cst_3 [0] : vector<8x64xf32> to vector<64xf32>
    %4 = vector.shape_cast %3 : vector<64xf32> to vector<1x64xf32>
    %cst_4 = arith.constant 8.000000e+00 : f32
    %5 = vector.broadcast %cst_4 : f32 to vector<1x64xf32>
    %6 = arith.divf %4, %5 : vector<1x64xf32>
    %7 = vector.broadcast %6 : vector<1x64xf32> to vector<8x64xf32>
    %8 = arith.subf %2, %7 : vector<8x64xf32>
    %9 = arith.mulf %8, %8 : vector<8x64xf32>
    %cst_5 = arith.constant dense<0.000000e+00> : vector<64xf32>
    %10 = vector.multi_reduction <add>, %9, %cst_5 [0] : vector<8x64xf32> to vector<64xf32>
    %11 = vector.shape_cast %10 : vector<64xf32> to vector<1x64xf32>
    %cst_6 = arith.constant 8.000000e+00 : f32
    %12 = vector.broadcast %cst_6 : f32 to vector<1x64xf32>
    %13 = arith.divf %11, %12 : vector<1x64xf32>
    %c0_7 = arith.constant 0 : index
    %c0_8 = arith.constant 0 : index
    %14 = vector.load %arg2[%c0_7, %c0_8] : memref<1x64xf32, #tpu.memory_space<vmem>>, vector<1x64xf32>
    %cst_9 = arith.constant 9.99999974E-6 : f32
    %15 = vector.broadcast %cst_9 : f32 to vector<1x64xf32>
    %16 = arith.addf %13, %15 : vector<1x64xf32>
    %17 = math.rsqrt %16 : vector<1x64xf32>
    %18 = arith.mulf %14, %17 : vector<1x64xf32>
    %19 = vector.broadcast %18 : vector<1x64xf32> to vector<8x64xf32>
    %20 = arith.mulf %8, %19 : vector<8x64xf32>
    %c0_10 = arith.constant 0 : index
    %c0_11 = arith.constant 0 : index
    %21 = vector.load %arg3[%c0_10, %c0_11] : memref<1x64xf32, #tpu.memory_space<vmem>>, vector<1x64xf32>
    %22 = vector.broadcast %21 : vector<1x64xf32> to vector<8x64xf32>
    %23 = arith.addf %20, %22 : vector<8x64xf32>
    %cst_12 = arith.constant 0.000000e+00 : f32
    %24 = vector.broadcast %cst_12 : f32 to vector<8x64xf32>
    %25 = arith.maximumf %23, %24 : vector<8x64xf32>
    %c0_13 = arith.constant 0 : index
    %c0_14 = arith.constant 0 : index
    %26 = vector.load %arg4[%c0_13, %c0_14] : memref<8x64xf32, #tpu.memory_space<vmem>>, vector<8x64xf32>
    tpu.vector_store %arg4[%c0_13, %c0_14], %25 {strides = array<i32>} : memref<8x64xf32, #tpu.memory_space<vmem>>, vector<8x64xf32>,
    return
  }
}

</mosaic_0001>

<llo_original>
// kernel: tpu_custom_call.1
$region0: #{tpu_custom_call.1}
  #allocation0 [shape = 'u32[]', space=smem, size = 0x4, offset = 0x4, fixed_abs, tag = 'smem constant byte address 0x4 - core index']
  #allocation1 [shape = 'u32[144,128]{1,0:T(1,128)}', space=vmem, size = 0x12000, scoped, tag = 'internal scratch']
  %s0 = inlined_call_operand.hbm [shape: f32[8,32], index: 0, kind: input, shape index: {}]
  %s1 = inlined_call_operand.hbm [shape: f32[32,64], index: 1, kind: input, shape index: {}]
  %s2 = inlined_call_operand.vmem [shape: f32[1,64], index: 2, kind: input, shape index: {}]
  %s3 = inlined_call_operand.vmem [shape: f32[1,64], index: 3, kind: input, shape index: {}]
  %s4 = inlined_call_operand.hbm [shape: f32[8,64], index: 4, kind: output, shape index: {}]
  %s5 = sld [smem:[#allocation0]]
  $region34: #{tpu_custom_call.1} parent=0
    _
  %s7 = ssub.s32 1, %s5
  %s8 = scalar_select 0, %s7, %s5
  $region1: #{tpu_custom_call.1} parent=0
    #allocation2 [shape = 'u8[4096]{0}', space=vmem, size = 0x1000, scoped, tag = 'input window, operand 0, single buffered']
    #allocation3 [shape = 's32[1]{0}', space=sflag, size = 0x4, scoped, tag = 'scoped memory for tpu_custom_call.1']
    #allocation4 [shape = 's32[1]{0}', space=sflag, size = 0x4, scoped, tag = 'scoped memory for tpu_custom_call.1']
    #allocation5 [shape = 'u8[16384]{0}', space=vmem, size = 0x4000, scoped, tag = 'input window, operand 1, single buffered']
    #allocation6 [shape = 's32[1]{0}', space=sflag, size = 0x4, scoped, tag = 'scoped memory for tpu_custom_call.1']
    #allocation7 [shape = 'u8[4096]{0}', space=vmem, size = 0x1000, scoped, tag = 'output window, operand 0, single buffered']
    %9 = vsyncpa [#allocation3], 0
    %10 = vsyncpa [#allocation6], 0
    %11 = vsyncpa [#allocation4], 0
    // Predicated region
    $region2: #{tpu_custom_call.1} parent=1 // pred_check
      _
    $region3: #{tpu_custom_call.1} parent=1 // pred_check_branch
      %13 = sbr.rel (0) target = $region5
    $region4: #{tpu_custom_call.1} parent=1 // pred_region
      %s15 = ssub.s32 128, 128
      %16 = vsyncadd [#allocation3], %s15
      %s18 = sshll.u32 [#allocation2], 4
      %s19 = int_to_ptr.vmem [resolvable:$true] %s18
      %21 = dma.hbm_to_vmem [thread:$0]  %s0, 128, %s19, [#allocation3]
    $region5: #{tpu_custom_call.1} parent=1 // pred_fallthru
      _
    // Predicated region
    $region6: #{tpu_custom_call.1} parent=1 // pred_check
      _
    $region7: #{tpu_custom_call.1} parent=1 // pred_check_branch
      %23 = sbr.rel (0) target = $region9
    $region8: #{tpu_custom_call.1} parent=1 // pred_region
      %s25 = ssub.s32 512, 512
      %26 = vsyncadd [#allocation6], %s25
      %s27 = sshll.u32 [#allocation5], 4
      %s28 = int_to_ptr.vmem [resolvable:$true] %s27
      %33 = dma.hbm_to_vmem [thread:$0]  %s1, 512, %s28, [#allocation6], 128, 128, 8
    $region9: #{tpu_custom_call.1} parent=1 // pred_fallthru
      _
    // Predicated region
    $region10: #{tpu_custom_call.1} parent=1 // pred_check
      _
    $region11: #{tpu_custom_call.1} parent=1 // pred_check_branch
      %35 = sbr.rel (0) target = $region13
    $region12: #{tpu_custom_call.1} parent=1 // pred_region
      _
    $region13: #{tpu_custom_call.1} parent=1 // pred_fallthru
      _
    // Predicated region
    $region14: #{tpu_custom_call.1} parent=1 // pred_check
      _
    $region15: #{tpu_custom_call.1} parent=1 // pred_check_branch
      %37 = sbr.rel (0) target = $region17
    $region16: #{tpu_custom_call.1} parent=1 // pred_region
      _
    $region17: #{tpu_custom_call.1} parent=1 // pred_fallthru
      _
    // Predicated region
    $region18: #{tpu_custom_call.1} parent=1 // pred_check
      _
    $region19: #{tpu_custom_call.1} parent=1 // pred_check_branch
      %39 = sbr.rel (0) target = $region21
    $region20: #{tpu_custom_call.1} parent=1 // pred_region
      %40 = dma.done [#allocation3], 128
    $region21: #{tpu_custom_call.1} parent=1 // pred_fallthru
      _
    // Predicated region
    $region22: #{tpu_custom_call.1} parent=1 // pred_check
      _
    $region23: #{tpu_custom_call.1} parent=1 // pred_check_branch
      %42 = sbr.rel (0) target = $region25
    $region24: #{tpu_custom_call.1} parent=1 // pred_region
      %43 = dma.done [#allocation6], 512
    $region25: #{tpu_custom_call.1} parent=1 // pred_fallthru
      _
    %v44 = vld [vmem:[#allocation5] sm:$0xff]
    %v45 = vld [vmem:[#allocation5 + $0x8] sm:$0xff]
    %v46 = vld [vmem:[#allocation5 + $0x10] sm:$0xff]
    %v47 = vld [vmem:[#allocation5 + $0x18] sm:$0xff]
    %v48 = vld [vmem:[#allocation2] sm:$0xff]
    %vm49 = vcmask 261120
    %v51 = vsel %vm49, %v48, 0
    %53 = vmatprep.subr.mxu0 0.0
    %54 = vmatpush1.msra.mxu0 %v44
    %55 = vmatprep.subr.mxu0 0.0
    %56 = vmatpush1.msra.mxu0 %v45
    %57 = vmatprep.subr.mxu0 0.0
    %58 = vmatpush1.msra.mxu0 %v46
    %59 = vmatprep.subr.mxu0 0.0
    %60 = vmatpush1.msra.mxu0 %v47
    %61 = vmatprep.subr.mxu0 0.0
    %62 = vmatpush1.msra.mxu0 0.0
    %63 = vmatprep.subr.mxu0 0.0
    %64 = vmatpush1.msra.mxu0 0.0
    %65 = vmatprep.subr.mxu0 0.0
    %66 = vmatpush1.msra.mxu0 0.0
    %67 = vmatprep.subr.mxu0 0.0
    %68 = vmatpush1.msra.mxu0 0.0
    %69 = vmatprep.subr.mxu0 0.0
    %70 = vmatpush1.msra.mxu0 0.0
    %71 = vmatprep.subr.mxu0 0.0
    %72 = vmatpush1.msra.mxu0 0.0
    %73 = vmatprep.subr.mxu0 0.0
    %74 = vmatpush1.msra.mxu0 0.0
    %75 = vmatprep.subr.mxu0 0.0
    %76 = vmatpush1.msra.mxu0 0.0
    %77 = vmatprep.subr.mxu0 0.0
    %78 = vmatpush1.msra.mxu0 0.0
    %79 = vmatprep.subr.mxu0 0.0
    %80 = vmatpush1.msra.mxu0 0.0
    %81 = vmatprep.subr.mxu0 0.0
    %82 = vmatpush1.msra.mxu0 0.0
    %83 = vmatprep.subr.mxu0 0.0
    %84 = vmatpush1.msra.mxu0 0.0
    %85 = vmatprep.subr.mxu0 0.0
    %86 = vmatpush1.msra.mxu0 0.0
    %87 = vmatprep.subr.mxu0 0.0
    %88 = vmatpush1.msra.mxu0 0.0
    %89 = vmatprep.subr.mxu0 0.0
    %90 = vmatpush1.msra.mxu0 0.0
    %91 = vmatprep.subr.mxu0 0.0
    %92 = vmatpush1.msra.mxu0 0.0
    %93 = vmatprep.subr.mxu0 0.0
    %94 = vmatpush1.msra.mxu0 0.0
    %95 = vmatprep.subr.mxu0 0.0
    %96 = vmatpush1.msra.mxu0 0.0
    %97 = vmatprep.subr.mxu0 0.0
    %98 = vmatpush1.msra.mxu0 0.0
    %99 = vmatprep.subr.mxu0 0.0
    %100 = vmatpush1.msra.mxu0 0.0
    %101 = vmatprep.subr.mxu0 0.0
    %102 = vmatpush1.msra.mxu0 0.0
    %103 = vmatprep.subr.mxu0 0.0
    %104 = vmatpush1.msra.mxu0 0.0
    %105 = vmatprep.subr.mxu0 0.0
    %106 = vmatpush1.msra.mxu0 0.0
    %107 = vmatprep.subr.mxu0 0.0
    %108 = vmatpush1.msra.mxu0 0.0
    %109 = vmatprep.subr.mxu0 0.0
    %110 = vmatpush1.msra.mxu0 0.0
    %111 = vmatprep.subr.mxu0 0.0
    %112 = vmatpush1.msra.mxu0 0.0
    %113 = vmatprep.subr.mxu0 0.0
    %114 = vmatpush1.msra.mxu0 0.0
    %115 = vmatprep.subr.mxu0 0.0
    %116 = vmatpush1.msra.mxu0 0.0
    %117 = vmatprep.mubr.f32.mxu0 0.0
    %118 = vmatmul.mubr.f32.gmra.mrb[0].mxu0 %v51
    %v119 = vpop.f32.mrb[0].mxu0
    %v120 = vadd.f32 0.0, %v119
    %v121 = vpop.f32.mrb[0].mxu0
    %122 = vdwg.mxu0
    %vm123 = vcmask 523264
    %v124 = vsel %vm123, %v120, 0.0
    %v125 = vrot.slane %v124, 4
    %v126 = vadd.f32 %v124, %v125
    %v127 = vrot.slane %v126, 2
    %v128 = vadd.f32 %v126, %v127
    %v129 = vrot.slane %v128, 1
    %v130 = vadd.f32 %v128, %v129
    %v131 = vrcp.pop 8.0
    %v132 = vmul.f32 %v130, %v131
    %v133 = vsub.f32 %v120, %v132
    %v134 = vmul.f32 %v133, %v133
    %v135 = vsel %vm123, %v134, 0.0
    %v136 = vrot.slane %v135, 4
    %v137 = vadd.f32 %v135, %v136
    %v138 = vrot.slane %v137, 2
    %v139 = vadd.f32 %v137, %v138
    %v140 = vrot.slane %v139, 1
    %v141 = vadd.f32 %v139, %v140
    %v142 = vmul.f32 %v141, %v131
    %v143 = vld [vmem:[%s2] sm:$0x1]
    %v144 = vadd.f32 %v142, 1e-05
    %v145 = vrsqrt.pop %v144
    %v146 = vmul.f32 %v143, %v145
    %v148 = vlaneseq
    %v149 = vshrl.u32 %v148, 7
    %v150 = vsub.s32 0, %v149
    %v151 = vrot.slane %v146, %v150
    %v153 = vmul.f32 %v133, %v151
    %v154 = vld [vmem:[%s3] sm:$0x1]
    %v156 = vlaneseq
    %v157 = vshrl.u32 %v156, 7
    %v158 = vsub.s32 0, %v157
    %v159 = vrot.slane %v154, %v158
    %v161 = vadd.f32 %v153, %v159
    %v162 = vmax.f32 %v161, 0.0
    %163 = vst.msk [vmem:[#allocation7] sm:$0xff] %vm123, %v162
    // Predicated region
    $region26: #{tpu_custom_call.1} parent=1 // pred_check
      _
    $region27: #{tpu_custom_call.1} parent=1 // pred_check_branch
      %165 = sbr.rel (0) target = $region29
    $region28: #{tpu_custom_call.1} parent=1 // pred_region
      %s167 = ssub.s32 128, 128
      %168 = vsyncadd [#allocation4], %s167
      %s170 = sshll.u32 [#allocation7], 4
      %s171 = int_to_ptr.vmem [resolvable:$true] %s170
      %173 = dma.vmem_to_hbm [thread:$0]  %s171, 128, %s4, [#allocation4]
    $region29: #{tpu_custom_call.1} parent=1 // pred_fallthru
      _
    // Predicated region
    $region30: #{tpu_custom_call.1} parent=1 // pred_check
      _
    $region31: #{tpu_custom_call.1} parent=1 // pred_check_branch
      %175 = sbr.rel (0) target = $region33
    $region32: #{tpu_custom_call.1} parent=1 // pred_region
      %176 = dma.done [#allocation4], 128
    $region33: #{tpu_custom_call.1} parent=1 // pred_fallthru
      _
    %177 = vsyncpa [#allocation3], 1
    %178 = vsyncpa [#allocation6], 1
    %179 = vsyncpa [#allocation4], 1

</llo_original>
